<compile_context>
chip_gen: v7x
topology: tpu7x:2x2x1
jax: 0.10.0
libtpu: 0.0.40
codegen_flags: <defaults>
</compile_context>

<pallas_src>
import functools

import jax
import jax.numpy as jnp
from jax.experimental import pallas as pl
from jax.experimental.pallas import tpu as pltpu


def _round_up(x, m):
    return ((x + m - 1) // m) * m


def _round_down(x, m):
    return (x // m) * m


def _vmem_capacity_bytes(default=64 * 1024 * 1024):
    """Generation-aware VMEM capacity (v5e/v6e: 128 MiB, v7x: 64 MiB per TensorCore)."""
    try:
        cap = getattr(pltpu.get_tpu_info(), "vmem_capacity_bytes", None)
        if cap:
            return int(cap)
    except Exception:  # not on TPU / query unsupported -> conservative (v7x-sized) default
        pass
    return default


# ----------------------------------------------------------------------------------------
# Dense path: HW % 128 == 0, pixels packed across sublanes x lanes.
# ----------------------------------------------------------------------------------------
def _ce_dense_kernel(x_ref, t_ref, w_ref, loss_ref, cnt_ref, *,
                     void_label, rows_total, ji_tiles):
    """One grid step.

    x_ref:   (C, S, 128) logits  (classes on the vreg-major dim, pixels dense on
                                  sublanes x lanes)
    t_ref:   (S, 128)    int32 labels
    w_ref:   (C, 1, 1)   per-class weights
    loss/cnt_ref: (S, 128) f32 resident accumulators for this (n, jo) output block.
    """
    jo = pl.program_id(1)
    ji = pl.program_id(2)

    @pl.when(ji == 0)
    def _():
        loss_ref[...] = jnp.zeros_like(loss_ref)
        cnt_ref[...] = jnp.zeros_like(cnt_ref)

    x = x_ref[...].astype(jnp.float32)                          # (C, S, 128)
    t = t_ref[...]                                              # (S, 128)
    w = w_ref[...].astype(jnp.float32)                          # (C, 1, 1)
    s_rows, lanes = t.shape

    # Row-index mask for the ragged tail: the last pixel tile (and any redundant
    # supertile step) may run past `rows_total`; that region of the buffer is unspecified.
    tile = jo * ji_tiles + ji
    row = jax.lax.broadcasted_iota(jnp.int32, (s_rows, lanes), 0)
    in_bounds = (tile * s_rows + row) < rows_total              # (S, 128)

    # Numerically stable log-sum-exp over the class axis: pure elementwise over fully
    # packed (S, 128) vregs -- no cross-lane (XLU) work.
    m = jnp.max(x, axis=0)                                      # (S, 128)
    lse = m + jnp.log(jnp.sum(jnp.exp(x - m[None]), axis=0))    # (S, 128)

    # Fused one-hot gather of x[t] and weight[t]; nll formed at per-pixel width.
    cls = jax.lax.broadcasted_iota(jnp.int32, x.shape, 0)       # (C, S, 128)
    onehot = cls == t[None]
    x_t = jnp.sum(jnp.where(onehot, x, 0.0), axis=0)            # (S, 128)
    w_t = jnp.sum(jnp.where(onehot, w, 0.0), axis=0)            # (S, 128)
    nll = w_t * (lse - x_t)                                     # (S, 128)

    # ignore_index semantics: numerator drops void / negative labels; divisor counts
    # t >= 0 exactly like the module's `(targets >= 0).sum()`.
    loss_valid = in_bounds & (t >= 0) & (t != void_label)
    div_valid = in_bounds & (t >= 0)

    # TODO(synk): labels in [C, INT_MAX) silently contribute 0 loss but are counted in the
    # divisor (PyTorch would raise); no cheap in-kernel assert outside debug mode.
    loss_ref[...] += jnp.where(loss_valid, nll, 0.0)            # selects, not mask-muls
    cnt_ref[...] += div_valid.astype(jnp.float32)


def _ce_dense_call(inputs, targets, w, void_label, N, C, HW, in_bytes,
                   vmem_cap, vmem_budget, target_block, rows_per_tile, pixel_supertiles):
    P = HW // 128                                   # pixel "rows" of 128 lanes each
    x = inputs.reshape(N, C, P, 128)                # metadata-only (native NCHW order)
    t = targets.reshape(N, P, 128).astype(jnp.int32)
    w3 = w.reshape(C, 1, 1)

    # Rows per tile: target a ~4-8 MiB logits block, stay inside the VMEM budget
    # (double-buffered logits + targets + two resident f32 accumulators + elementwise temps).
    per_row_bytes = 128 * (2 * C * in_bytes + 2 * 4 + 4 * 4 + 6 * C * 4)
    if rows_per_tile is None:
        s_target = max(8, _round_down(target_block // (C * 128 * in_bytes), 8))
        s_budget = max(8, _round_down(vmem_budget // per_row_bytes, 8))
        S = min(s_target, s_budget)
    else:
        S = max(1, int(rows_per_tile))
    if S >= P:
        S = P                                       # full-dim block (always legal)
    else:
        S = max(8, _round_down(S, 8))               # (8, 128)-aligned tile

    tiles = pl.cdiv(P, S)
    if pixel_supertiles is None:
        # Keep both v7x TensorCores busy even at N == 1; no-op on single-TC chips.
        JO = 1 if N >= 2 else min(2, tiles)
    else:
        JO = max(1, min(int(pixel_supertiles), tiles))
    JI = pl.cdiv(tiles, JO)
    last_tile = tiles - 1                           # clamp so no DMA starts out of bounds

    est_bytes = per_row_bytes * S + 4 * C + 4096
    vmem_limit = int(min(int(0.9 * vmem_cap),
                         max(32 * 1024 * 1024, int(2.5 * est_bytes))))

    kernel = functools.partial(_ce_dense_kernel, void_label=void_label,
                               rows_total=P, ji_tiles=JI)

    return pl.pallas_call(
        kernel,
        out_shape=(
            jax.ShapeDtypeStruct((N, JO, S, 128), jnp.float32),
            jax.ShapeDtypeStruct((N, JO, S, 128), jnp.float32),
        ),
        grid_spec=pltpu.PrefetchScalarGridSpec(
            num_scalar_prefetch=0,
            grid=(N, JO, JI),
            in_specs=[
                pl.BlockSpec((None, C, S, 128),
                             lambda n, jo, ji: (n, 0, jnp.minimum(jo * JI + ji, last_tile), 0)),
                pl.BlockSpec((None, S, 128),
                             lambda n, jo, ji: (n, jnp.minimum(jo * JI + ji, last_tile), 0)),
                pl.BlockSpec((C, 1, 1), lambda n, jo, ji: (0, 0, 0)),
            ],
            out_specs=(
                pl.BlockSpec((None, None, S, 128), lambda n, jo, ji: (n, jo, 0, 0)),
                pl.BlockSpec((None, None, S, 128), lambda n, jo, ji: (n, jo, 0, 0)),
            ),
        ),
        compiler_params=pltpu.CompilerParams(
            dimension_semantics=("parallel", "parallel", "arbitrary"),
            vmem_limit_bytes=vmem_limit,
        ),
    )(x, t, w3)


# ----------------------------------------------------------------------------------------
# Fallback lane path: HW % 128 != 0 (pixels on lanes only; no padding copy needed).
# ----------------------------------------------------------------------------------------
def _ce_lane_kernel(x_ref, t_ref, w_ref, loss_ref, cnt_ref, *, void_label, hw, tile_px):
    j = pl.program_id(1)

    @pl.when(j == 0)
    def _():
        loss_ref[...] = jnp.zeros_like(loss_ref)
        cnt_ref[...] = jnp.zeros_like(cnt_ref)

    x = x_ref[...].astype(jnp.float32)              # (C, T)
    t = t_ref[...]                                  # (1, T)
    w = w_ref[...].astype(jnp.float32)              # (C, 1)

    lane = jax.lax.broadcasted_iota(jnp.int32, t.shape, 1)
    in_bounds = (j * tile_px + lane) < hw

    m = jnp.max(x, axis=0, keepdims=True)
    lse = m + jnp.log(jnp.sum(jnp.exp(x - m), axis=0, keepdims=True))

    cls = jax.lax.broadcasted_iota(jnp.int32, x.shape, 0)
    onehot = cls == t
    x_t = jnp.sum(jnp.where(onehot, x, 0.0), axis=0, keepdims=True)
    w_t = jnp.sum(jnp.where(onehot, w, 0.0), axis=0, keepdims=True)
    nll = w_t * (lse - x_t)

    loss_valid = in_bounds & (t >= 0) & (t != void_label)
    div_valid = in_bounds & (t >= 0)

    loss_ref[...] += jnp.where(loss_valid, nll, 0.0)
    cnt_ref[...] += div_valid.astype(jnp.float32)


def _ce_lane_call(inputs, targets, w, void_label, N, C, HW, in_bytes,
                  vmem_cap, vmem_budget, target_block, tile_pixels):
    x = inputs.reshape(N, C, HW)                    # metadata-only, native NCHW order
    t = targets.reshape(N, 1, HW).astype(jnp.int32)
    w2 = w.reshape(C, 1)

    per_px_bytes = 2 * C * in_bytes + 2 * 4 + 4 * 4 + 6 * C * 4
    if tile_pixels is None:
        t_target = max(128, _round_down(target_block // (C * in_bytes), 128))
        t_budget = max(128, _round_down(vmem_budget // per_px_bytes, 128))
        T = min(t_target, t_budget)
    else:
        T = max(128, _round_up(int(tile_pixels), 128))
    T = min(T, _round_up(HW, 128))

    num_j = pl.cdiv(HW, T)
    est_bytes = per_px_bytes * T + 4 * C + 4096
    vmem_limit = int(min(int(0.9 * vmem_cap),
                         max(32 * 1024 * 1024, int(2.5 * est_bytes))))

    kernel = functools.partial(_ce_lane_kernel, void_label=void_label, hw=HW, tile_px=T)

    return pl.pallas_call(
        kernel,
        out_shape=(
            jax.ShapeDtypeStruct((N, 1, T), jnp.float32),
            jax.ShapeDtypeStruct((N, 1, T), jnp.float32),
        ),
        grid_spec=pltpu.PrefetchScalarGridSpec(
            num_scalar_prefetch=0,
            grid=(N, num_j),
            in_specs=[
                pl.BlockSpec((None, C, T), lambda n, j: (n, 0, j)),
                pl.BlockSpec((None, 1, T), lambda n, j: (n, 0, j)),
                pl.BlockSpec((C, 1), lambda n, j: (0, 0)),
            ],
            out_specs=(
                pl.BlockSpec((None, 1, T), lambda n, j: (n, 0, 0)),
                pl.BlockSpec((None, 1, T), lambda n, j: (n, 0, 0)),
            ),
        ),
        compiler_params=pltpu.CompilerParams(
            dimension_semantics=("parallel", "arbitrary"),
            vmem_limit_bytes=vmem_limit,
        ),
    )(x, t, w2)


# ----------------------------------------------------------------------------------------
# Public wrapper.
# ----------------------------------------------------------------------------------------
def cross_entropy_loss_2d(inputs, targets, weight, void_label=-1,
                          rows_per_tile=None, pixel_supertiles=None, tile_pixels=None):
    """CrossEntropyLoss2d forward.

    inputs:  (N, C, H, W) float logits (f32 or bf16 -- DMA'd in their native dtype).
    targets: (N, H, W)    integer labels; void_label / negatives are ignored.
    weight:  (C,)         per-class loss weights.
    Returns a float32 scalar:
      sum(weighted per-pixel CE over valid pixels) / (targets >= 0).sum(), or 0.0 if no
      pixel has a non-negative label (the module's all-void early exit).
    """
    N, C, H, W = inputs.shape
    HW = H * W
    in_bytes = jnp.dtype(inputs.dtype).itemsize

    vmem_cap = _vmem_capacity_bytes()
    vmem_budget = int(0.35 * vmem_cap)                           # budget used to size tiles
    target_block = (8 if vmem_cap >= 96 * 1024 * 1024 else 4) * 1024 * 1024

    w1 = jnp.asarray(weight, jnp.float32)

    if HW % 128 == 0:
        loss_part, cnt_part = _ce_dense_call(
            inputs, targets, w1, void_label, N, C, HW, in_bytes,
            vmem_cap, vmem_budget, target_block, rows_per_tile, pixel_supertiles)
    else:
        loss_part, cnt_part = _ce_lane_call(
            inputs, targets, w1, void_label, N, C, HW, in_bytes,
            vmem_cap, vmem_budget, target_block, tile_pixels)

    loss_sum = jnp.sum(loss_part)
    valid_cnt = jnp.sum(cnt_part)
    # matches: `if (targets == -1).all(): return 0.0`, else sum(loss) / (targets >= 0).sum()
    return jnp.where(valid_cnt > 0, loss_sum / valid_cnt, jnp.float32(0.0))


def _reference(inputs, targets, weight, void_label=-1):
    """Pure-JAX reference mirroring nn.CrossEntropyLoss(weight, reduction='none', ignore_index)."""
    N, C, H, W = inputs.shape
    x = jnp.transpose(inputs, (0, 2, 3, 1)).reshape(-1, C).astype(jnp.float32)
    t = targets.reshape(-1).astype(jnp.int32)
    logp = jax.nn.log_softmax(x, axis=-1)
    valid = jnp.logical_and(t >= 0, t != void_label)
    t_safe = jnp.where(valid, t, 0)
    nll = -jnp.take_along_axis(logp, t_safe[:, None], axis=-1)[:, 0]
    w = jnp.asarray(weight, jnp.float32)[t_safe]
    loss_all = jnp.where(valid, w * nll, 0.0)
    divisor = jnp.sum((t >= 0).astype(jnp.float32))
    return jnp.where(divisor > 0, jnp.sum(loss_all) / divisor, jnp.float32(0.0))


if __name__ == "__main__":
    key = jax.random.PRNGKey(0)
    k1, k2, k3, k4, k5, k6 = jax.random.split(key, 6)

    # --- 1) primary dense path: N=2, C=4, 16x16 (HW % 128 == 0), f32 logits ---
    N, C, H, W = 2, 4, 16, 16
    weight = 0.5 + jax.random.uniform(k1, (C,), jnp.float32)
    inputs = jax.random.normal(k2, (N, C, H, W), jnp.float32)
    targets = jax.random.randint(k3, (N, H, W), -1, C).astype(jnp.int32)

    out = jax.block_until_ready(cross_entropy_loss_2d(inputs, targets, weight))
    ref = jax.block_until_ready(_reference(inputs, targets, weight))
    assert jnp.allclose(out, ref, rtol=1e-4, atol=1e-5), (out, ref)

    # --- 2) bf16 logits fast path (native-dtype DMA, upcast inside the kernel) ---
    inputs_bf16 = inputs.astype(jnp.bfloat16)
    out_bf = jax.block_until_ready(cross_entropy_loss_2d(inputs_bf16, targets, weight))
    ref_bf = jax.block_until_ready(_reference(inputs_bf16, targets, weight))
    assert jnp.allclose(out_bf, ref_bf, rtol=5e-3, atol=1e-4), (out_bf, ref_bf)

    # --- 3) multi-tile reduction + parallel pixel-supertile axis (N=1, ragged row tail) ---
    N2, C2, H2, W2 = 1, 5, 40, 64             # HW = 2560 -> 20 rows of 128 pixels
    weight2 = 0.5 + jax.random.uniform(k4, (C2,), jnp.float32)
    inputs2 = jax.random.normal(k5, (N2, C2, H2, W2), jnp.float32)
    targets2 = jax.random.randint(k6, (N2, H2, W2), -1, C2).astype(jnp.int32)
    out2 = jax.block_until_ready(cross_entropy_loss_2d(
        inputs2, targets2, weight2, rows_per_tile=8, pixel_supertiles=2))
    ref2 = jax.block_until_ready(_reference(inputs2, targets2, weight2))
    assert jnp.allclose(out2, ref2, rtol=1e-4, atol=1e-5), (out2, ref2)

    # --- 4) lane-layout fallback for HW % 128 != 0 (no padding copy of logits) ---
    H3, W3 = 15, 17                            # HW = 255
    inputs3 = jax.random.normal(k5, (N, C, H3, W3), jnp.float32)
    targets3 = jax.random.randint(k6, (N, H3, W3), -1, C).astype(jnp.int32)
    out3 = jax.block_until_ready(cross_entropy_loss_2d(
        inputs3, targets3, weight, tile_pixels=128))
    ref3 = jax.block_until_ready(_reference(inputs3, targets3, weight))
    assert jnp.allclose(out3, ref3, rtol=1e-4, atol=1e-5), (out3, ref3)

    # --- 5) all-void early-exit path ---
    zero = jax.block_until_ready(cross_entropy_loss_2d(
        inputs, jnp.full((N, H, W), -1, jnp.int32), weight))
    assert jnp.allclose(zero, 0.0), zero

    print("KERNEL_OK")
</pallas_src>

<mosaic_0001>
module attributes {stable_mosaic.version = 11 : i64} {
  func.func @_ce_dense_kernel(%arg0: i32, %arg1: i32, %arg2: i32, %arg3: memref<1x4x2x128xf32, #tpu.memory_space<vmem>>, %arg4: memref<1x2x128xi32, #tpu.memory_space<vmem>>, %arg5: memref<4x1x1xf32, #tpu.memory_space<vmem>>, %arg6: memref<1x1x2x128xf32, #tpu.memory_space<vmem>>, %arg7: memref<1x1x2x128xf32, #tpu.memory_space<vmem>>) attributes {dimension_semantics = [#tpu.dimension_semantics<parallel>, #tpu.dimension_semantics<parallel>, #tpu.dimension_semantics<arbitrary>], iteration_bounds = array<i64: 2, 1, 1>, scalar_prefetch = 0 : i64, scratch_operands = 0 : i64, tpu.core_type = #tpu.core_type<tc>, window_params = [{transform_indices = @transform_0, window_bounds = array<i64: 1, 4, 2, 128>}, {transform_indices = @transform_1, window_bounds = array<i64: 1, 2, 128>}, {pipeline_mode = #tpu.pipeline_mode<synchronous>, transform_indices = @transform_2, window_bounds = array<i64: 4, 1, 1>}, {transform_indices = @transform_3, window_bounds = array<i64: 1, 1, 2, 128>}, {transform_indices = @transform_4, window_bounds = array<i64: 1, 1, 2, 128>}]} {
    %c0_i32 = arith.constant 0 : i32
    %0 = arith.cmpi eq, %arg2, %c0_i32 : i32
    %1 = arith.extui %0 : i1 to i32
    %c0_i32_0 = arith.constant 0 : i32
    %2 = arith.cmpi ne, %1, %c0_i32_0 : i32
    scf.if %2 {
      %cst_35 = arith.constant 0.000000e+00 : f32
      %63 = vector.broadcast %cst_35 : f32 to vector<2x128xf32>
      %c0_36 = arith.constant 0 : index
      %c0_37 = arith.constant 0 : index
      %c0_38 = arith.constant 0 : index
      %c0_39 = arith.constant 0 : index
      %64 = vector.load %arg6[%c0_36, %c0_37, %c0_38, %c0_39] : memref<1x1x2x128xf32, #tpu.memory_space<vmem>>, vector<1x1x2x128xf32>
      %65 = vector.shape_cast %64 : vector<1x1x2x128xf32> to vector<2x128xf32>
      %66 = vector.shape_cast %63 : vector<2x128xf32> to vector<1x1x2x128xf32>
      tpu.vector_store %arg6[%c0_36, %c0_37, %c0_38, %c0_39], %66 {strides = array<i32>} : memref<1x1x2x128xf32, #tpu.memory_space<vmem>>, vector<1x1x2x128xf32>,
      %cst_40 = arith.constant 0.000000e+00 : f32
      %67 = vector.broadcast %cst_40 : f32 to vector<2x128xf32>
      %c0_41 = arith.constant 0 : index
      %c0_42 = arith.constant 0 : index
      %c0_43 = arith.constant 0 : index
      %c0_44 = arith.constant 0 : index
      %68 = vector.load %arg7[%c0_41, %c0_42, %c0_43, %c0_44] : memref<1x1x2x128xf32, #tpu.memory_space<vmem>>, vector<1x1x2x128xf32>
      %69 = vector.shape_cast %68 : vector<1x1x2x128xf32> to vector<2x128xf32>
      %70 = vector.shape_cast %67 : vector<2x128xf32> to vector<1x1x2x128xf32>
      tpu.vector_store %arg7[%c0_41, %c0_42, %c0_43, %c0_44], %70 {strides = array<i32>} : memref<1x1x2x128xf32, #tpu.memory_space<vmem>>, vector<1x1x2x128xf32>,
    } else {
    }
    %c0 = arith.constant 0 : index
    %c0_1 = arith.constant 0 : index
    %c0_2 = arith.constant 0 : index
    %c0_3 = arith.constant 0 : index
    %3 = vector.load %arg3[%c0, %c0_1, %c0_2, %c0_3] : memref<1x4x2x128xf32, #tpu.memory_space<vmem>>, vector<1x4x2x128xf32>
    %4 = vector.shape_cast %3 : vector<1x4x2x128xf32> to vector<4x2x128xf32>
    %c0_4 = arith.constant 0 : index
    %c0_5 = arith.constant 0 : index
    %c0_6 = arith.constant 0 : index
    %5 = vector.load %arg4[%c0_4, %c0_5, %c0_6] : memref<1x2x128xi32, #tpu.memory_space<vmem>>, vector<1x2x128xi32>
    %6 = vector.shape_cast %5 : vector<1x2x128xi32> to vector<2x128xi32>
    %c0_7 = arith.constant 0 : index
    %c0_8 = arith.constant 0 : index
    %c0_9 = arith.constant 0 : index
    %7 = vector.load %arg5[%c0_7, %c0_8, %c0_9] : memref<4x1x1xf32, #tpu.memory_space<vmem>>, vector<4x1x1xf32>
    %c1_i32 = arith.constant 1 : i32
    %8 = arith.muli %arg1, %c1_i32 : i32
    %9 = arith.addi %8, %arg2 : i32
    %10 = tpu.iota {dimensions = array<i32: 0>} : vector<2x128xi32>
    %c2_i32 = arith.constant 2 : i32
    %11 = arith.muli %9, %c2_i32 : i32
    %12 = vector.broadcast %11 : i32 to vector<2x128xi32>
    %13 = arith.addi %12, %10 : vector<2x128xi32>
    %c2_i32_10 = arith.constant 2 : i32
    %14 = vector.broadcast %c2_i32_10 : i32 to vector<2x128xi32>
    %15 = arith.cmpi slt, %13, %14 : vector<2x128xi32>
    %cst = arith.constant dense<0xFF800000> : vector<2x128xf32>
    %16 = vector.multi_reduction <maximumf>, %4, %cst [0] : vector<4x2x128xf32> to vector<2x128xf32>
    %17 = vector.shape_cast %16 : vector<2x128xf32> to vector<1x2x128xf32>
    %18 = vector.broadcast %17 : vector<1x2x128xf32> to vector<4x2x128xf32>
    %19 = arith.subf %4, %18 : vector<4x2x128xf32>
    %20 = math.exp %19 : vector<4x2x128xf32>
    %cst_11 = arith.constant dense<0.000000e+00> : vector<2x128xf32>
    %21 = vector.multi_reduction <add>, %20, %cst_11 [0] : vector<4x2x128xf32> to vector<2x128xf32>
    %22 = math.log %21 : vector<2x128xf32>
    %23 = arith.addf %16, %22 : vector<2x128xf32>
    %24 = tpu.iota {dimensions = array<i32: 0>} : vector<4x2x128xi32>
    %25 = vector.shape_cast %6 : vector<2x128xi32> to vector<1x2x128xi32>
    %26 = vector.broadcast %25 : vector<1x2x128xi32> to vector<4x2x128xi32>
    %27 = arith.cmpi eq, %24, %26 : vector<4x2x128xi32>
    %cst_12 = arith.constant 0.000000e+00 : f32
    %28 = vector.broadcast %cst_12 : f32 to vector<4x2x128xf32>
    %29 = arith.select %27, %4, %28 : vector<4x2x128xi1>, vector<4x2x128xf32>
    %cst_13 = arith.constant dense<0.000000e+00> : vector<2x128xf32>
    %30 = vector.multi_reduction <add>, %29, %cst_13 [0] : vector<4x2x128xf32> to vector<2x128xf32>
    %cst_14 = arith.constant 0.000000e+00 : f32
    %31 = vector.shape_cast %7 : vector<4x1x1xf32> to vector<4x1x1xf32>
    %32 = vector.broadcast %31 : vector<4x1x1xf32> to vector<4x2x128xf32>
    %33 = vector.broadcast %cst_14 : f32 to vector<4x2x128xf32>
    %34 = arith.select %27, %32, %33 : vector<4x2x128xi1>, vector<4x2x128xf32>
    %cst_15 = arith.constant dense<0.000000e+00> : vector<2x128xf32>
    %35 = vector.multi_reduction <add>, %34, %cst_15 [0] : vector<4x2x128xf32> to vector<2x128xf32>
    %36 = arith.subf %23, %30 : vector<2x128xf32>
    %37 = arith.mulf %35, %36 : vector<2x128xf32>
    %c0_i32_16 = arith.constant 0 : i32
    %38 = vector.broadcast %c0_i32_16 : i32 to vector<2x128xi32>
    %39 = arith.cmpi sge, %6, %38 : vector<2x128xi32>
    %40 = arith.andi %15, %39 : vector<2x128xi1>
    %c-1_i32 = arith.constant -1 : i32
    %41 = vector.broadcast %c-1_i32 : i32 to vector<2x128xi32>
    %42 = arith.cmpi ne, %6, %41 : vector<2x128xi32>
    %43 = arith.andi %40, %42 : vector<2x128xi1>
    %c0_i32_17 = arith.constant 0 : i32
    %44 = vector.broadcast %c0_i32_17 : i32 to vector<2x128xi32>
    %45 = arith.cmpi sge, %6, %44 : vector<2x128xi32>
    %46 = arith.andi %15, %45 : vector<2x128xi1>
    %c0_18 = arith.constant 0 : index
    %c0_19 = arith.constant 0 : index
    %c0_20 = arith.constant 0 : index
    %c0_21 = arith.constant 0 : index
    %47 = vector.load %arg6[%c0_18, %c0_19, %c0_20, %c0_21] : memref<1x1x2x128xf32, #tpu.memory_space<vmem>>, vector<1x1x2x128xf32>
    %48 = vector.shape_cast %47 : vector<1x1x2x128xf32> to vector<2x128xf32>
    %cst_22 = arith.constant 0.000000e+00 : f32
    %49 = vector.broadcast %cst_22 : f32 to vector<2x128xf32>
    %50 = arith.select %43, %37, %49 : vector<2x128xi1>, vector<2x128xf32>
    %51 = arith.addf %48, %50 : vector<2x128xf32>
    %c0_23 = arith.constant 0 : index
    %c0_24 = arith.constant 0 : index
    %c0_25 = arith.constant 0 : index
    %c0_26 = arith.constant 0 : index
    %52 = vector.load %arg6[%c0_23, %c0_24, %c0_25, %c0_26] : memref<1x1x2x128xf32, #tpu.memory_space<vmem>>, vector<1x1x2x128xf32>
    %53 = vector.shape_cast %52 : vector<1x1x2x128xf32> to vector<2x128xf32>
    %54 = vector.shape_cast %51 : vector<2x128xf32> to vector<1x1x2x128xf32>
    tpu.vector_store %arg6[%c0_23, %c0_24, %c0_25, %c0_26], %54 {strides = array<i32>} : memref<1x1x2x128xf32, #tpu.memory_space<vmem>>, vector<1x1x2x128xf32>,
    %c0_27 = arith.constant 0 : index
    %c0_28 = arith.constant 0 : index
    %c0_29 = arith.constant 0 : index
    %c0_30 = arith.constant 0 : index
    %55 = vector.load %arg7[%c0_27, %c0_28, %c0_29, %c0_30] : memref<1x1x2x128xf32, #tpu.memory_space<vmem>>, vector<1x1x2x128xf32>
    %56 = vector.shape_cast %55 : vector<1x1x2x128xf32> to vector<2x128xf32>
    %57 = arith.extui %46 : vector<2x128xi1> to vector<2x128xi32>
    %58 = arith.sitofp %57 : vector<2x128xi32> to vector<2x128xf32>
    %59 = arith.addf %56, %58 : vector<2x128xf32>
    %c0_31 = arith.constant 0 : index
    %c0_32 = arith.constant 0 : index
    %c0_33 = arith.constant 0 : index
    %c0_34 = arith.constant 0 : index
    %60 = vector.load %arg7[%c0_31, %c0_32, %c0_33, %c0_34] : memref<1x1x2x128xf32, #tpu.memory_space<vmem>>, vector<1x1x2x128xf32>
    %61 = vector.shape_cast %60 : vector<1x1x2x128xf32> to vector<2x128xf32>
    %62 = vector.shape_cast %59 : vector<2x128xf32> to vector<1x1x2x128xf32>
    tpu.vector_store %arg7[%c0_31, %c0_32, %c0_33, %c0_34], %62 {strides = array<i32>} : memref<1x1x2x128xf32, #tpu.memory_space<vmem>>, vector<1x1x2x128xf32>,
    return
  }
  func.func @transform_0(%arg0: i32, %arg1: i32, %arg2: i32) -> (i32, i32, i32, i32) {
    %c1_i32 = arith.constant 1 : i32
    %0 = arith.muli %arg1, %c1_i32 : i32
    %1 = arith.addi %0, %arg2 : i32
    %c0_i32 = arith.constant 0 : i32
    %2 = arith.minsi %1, %c0_i32 : i32
    %c0_i32_0 = arith.constant 0 : i32
    %c0_i32_1 = arith.constant 0 : i32
    %c0_i32_2 = arith.constant 0 : i32
    return %arg0, %c0_i32_0, %2, %c0_i32_1 : i32, i32, i32, i32
  }
  func.func @transform_1(%arg0: i32, %arg1: i32, %arg2: i32) -> (i32, i32, i32) {
    %c1_i32 = arith.constant 1 : i32
    %0 = arith.muli %arg1, %c1_i32 : i32
    %1 = arith.addi %0, %arg2 : i32
    %c0_i32 = arith.constant 0 : i32
    %2 = arith.minsi %1, %c0_i32 : i32
    %c0_i32_0 = arith.constant 0 : i32
    %c0_i32_1 = arith.constant 0 : i32
    return %arg0, %2, %c0_i32_0 : i32, i32, i32
  }
  func.func @transform_2(%arg0: i32, %arg1: i32, %arg2: i32) -> (i32, i32, i32) {
    %c0_i32 = arith.constant 0 : i32
    %c0_i32_0 = arith.constant 0 : i32
    %c0_i32_1 = arith.constant 0 : i32
    %c0_i32_2 = arith.constant 0 : i32
    return %c0_i32, %c0_i32_0, %c0_i32_1 : i32, i32, i32
  }
  func.func @transform_3(%arg0: i32, %arg1: i32, %arg2: i32) -> (i32, i32, i32, i32) {
    %c0_i32 = arith.constant 0 : i32
    %c0_i32_0 = arith.constant 0 : i32
    %c0_i32_1 = arith.constant 0 : i32
    return %arg0, %arg1, %c0_i32, %c0_i32_0 : i32, i32, i32, i32
  }
  func.func @transform_4(%arg0: i32, %arg1: i32, %arg2: i32) -> (i32, i32, i32, i32) {
    %c0_i32 = arith.constant 0 : i32
    %c0_i32_0 = arith.constant 0 : i32
    %c0_i32_1 = arith.constant 0 : i32
    return %arg0, %arg1, %c0_i32, %c0_i32_0 : i32, i32, i32, i32
  }
}

</mosaic_0001>

<llo_original>
// kernel: tpu_custom_call.1
$region0: #{tpu_custom_call.1}
  #allocation0 [shape = 'u32[]', space=smem, size = 0x4, offset = 0x4, fixed_abs, tag = 'smem constant byte address 0x4 - core index']
  #allocation1 [shape = 'u32[144,128]{1,0:T(1,128)}', space=vmem, size = 0x12000, scoped, tag = 'internal scratch']
  %s0 = inlined_call_operand.hbm [shape: f32[2,4,2,128], index: 0, kind: input, shape index: {}]
  %s1 = inlined_call_operand.vmem [shape: s32[2,2,128], index: 1, kind: input, shape index: {}]
  %s2 = inlined_call_operand.vmem [shape: f32[4,1,1], index: 2, kind: input, shape index: {}]
  %s3 = inlined_call_operand.hbm [shape: f32[2,1,2,128], index: 3, kind: output, shape index: {0}]
  %s4 = inlined_call_operand.hbm [shape: f32[2,1,2,128], index: 4, kind: output, shape index: {1}]
  %5 = xla_tuple %s3, %s4
  %s6 = sld [smem:[#allocation0]]
  $region61: #{tpu_custom_call.1} parent=0
    _
  %s8 = ssub.s32 1, %s6
  %s9 = scalar_select 0, %s8, %s6
  $region1: #{tpu_custom_call.1} parent=0
    #allocation2 [shape = 'u8[8192]{0}', space=vmem, size = 0x2000, scoped, tag = 'input window, operand 0']
    #allocation3 [shape = 's32[2]{0}', space=sflag, size = 0x8, scoped, tag = 'scoped memory for tpu_custom_call.1']
    #allocation4 [shape = 's32[2]{0}', space=sflag, size = 0x8, scoped, tag = 'scoped memory for tpu_custom_call.1']
    #allocation5 [shape = 'u8[2048]{0}', space=vmem, size = 0x800, scoped, tag = 'output window, operand 0']
    #allocation6 [shape = 'u8[2048]{0}', space=vmem, size = 0x800, scoped, tag = 'output window, operand 1']
    #allocation7 [shape = 's32[2]{0}', space=sflag, size = 0x8, scoped, tag = 'scoped memory for tpu_custom_call.1']
    %10 = vsyncpa [#allocation3], 0
    %s11 = scalar_lea.sflag [#allocation3], 1
    %12 = vsyncpa %s11, 0
    %13 = vsyncpa [#allocation4], 0
    %s14 = scalar_lea.sflag [#allocation4], 1
    %15 = vsyncpa %s14, 0
    %16 = vsyncpa [#allocation7], 0
    %s17 = scalar_lea.sflag [#allocation7], 1
    %18 = vsyncpa %s17, 0
    loop: start=0, step=1, limit=4
    $region2: #{tpu_custom_call.1} parent=1 // loop_pre_header
      _
    $region3: #{tpu_custom_call.1} parent=1 // loop_header
      %s20 = sphi 0, %s24
      %p21 = scmp.ge.s32.totalorder %s20, 4
      %s27 = sphi 0, %s46
      %s28 = sphi 0, %s42
      %s29 = sphi 0, %s38
      %s30 = sphi 0, %s27
      %s31 = sphi 0, %s28
      %s32 = sphi 0, %s29
      %s33 = sphi 0, %s30
      %s34 = sphi 0, %s31
      %s35 = sphi 0, %s32
      %s57 = sphi 0, %s59
      %s60 = sphi 0, %s57
      %s61 = sphi 0, %s60
      %s77 = sphi 0, %s61
      %s91 = sphi 0, %s93
      %s94 = sphi 0, %s91
      %s95 = sphi 0, %s94
      %s111 = sphi 0, %s95
      %s115 = sphi 0, %s115
      %s117 = sphi 0, %s115
      %s118 = sphi 0, %s117
      %s132 = sphi 0, %s118
      %s140 = sphi 0, %s142
      %s143 = sphi 0, %s140
      %s144 = sphi 0, %s143
      %s160 = sphi 0, %s144
      %s168 = sphi 0, %s170
      %s171 = sphi 0, %s168
      %s172 = sphi 0, %s171
      %s188 = sphi 0, %s172
    $region4: #{tpu_custom_call.1} parent=1 // loop_header_branch
      %23 = sbr.rel (%p21) target = $region8
    $region5: #{tpu_custom_call.1} parent=1 // loop_body
      %s25 = ssub.s32 %s20, 1
      %s26 = ssub.s32 %s20, 2
      %s36 = sadd.s32 1, %s29
      %p37 = scmp.ge.s32.totalorder %s36, 1
      %s38 = scalar_select %p37, 0, %s36
      %s39 = sadd.s32 1, %s28
      %s40 = scalar_select %p37, %s39, %s28
      %p41 = scmp.ge.s32.totalorder %s40, 1
      %s42 = scalar_select %p41, 0, %s40
      %s43 = sadd.s32 1, %s27
      %s44 = scalar_select %p41, %s43, %s27
      %p45 = scmp.ge.s32.totalorder %s44, 2
      %s46 = scalar_select %p45, 0, %s44
      %s47 = sadd.s32 %s28, %s29
      %p48 = scmp.lt.s32.totalorder %s47, 0
      %s49 = scalar_select %p48, %s47, 0
      %s50 = sadd.s32 %s42, %s38
      %p51 = scmp.lt.s32.totalorder %s50, 0
      %s52 = scalar_select %p51, %s50, 0
      %s53 = ssub.s32 %s27, %s46
      %s54 = ssub.s32 %s49, %s52
      %s55 = sor.u32 %s53, %s54
      %p56 = scmp.eq.s32.totalorder %s55, 0
      %s58 = sadd.s32 %s57, 1
      %s59 = scalar_select %p56, %s57, %s58
      %p62 = pneg %p56
      %p63 = scmp.eq.s32.totalorder %s20, 1
      %p64 = por %p62, %p63
      %p65 = scmp.ne.s32.totalorder %s57, %s60
      %p66 = scmp.eq.s32.totalorder %s20, 0
      %p67 = por %p65, %p66
      %p68 = scmp.ne.s32.totalorder %s57, %s60
      %p69 = scmp.eq.s32.totalorder %s25, 1
      %p70 = por %p68, %p69
      %p71 = scmp.ne.s32.totalorder %s60, %s61
      %p72 = scmp.eq.s32.totalorder %s25, 0
      %p73 = por %p71, %p72
      %p74 = scmp.ne.s32.totalorder %s60, %s61
      %p75 = scmp.eq.s32.totalorder %s26, 1
      %p76 = por %p74, %p75
      %p78 = scmp.ne.s32.totalorder %s61, %s77
      %p79 = scmp.eq.s32.totalorder %s26, 0
      %p80 = por %p78, %p79
      %s81 = sadd.s32 %s28, %s29
      %p82 = scmp.lt.s32.totalorder %s81, 0
      %s83 = scalar_select %p82, %s81, 0
      %s84 = sadd.s32 %s42, %s38
      %p85 = scmp.lt.s32.totalorder %s84, 0
      %s86 = scalar_select %p85, %s84, 0
      %s87 = ssub.s32 %s27, %s46
      %s88 = ssub.s32 %s83, %s86
      %s89 = sor.u32 %s87, %s88
      %p90 = scmp.eq.s32.totalorder %s89, 0
      %s92 = sadd.s32 %s91, 1
      %s93 = scalar_select %p90, %s91, %s92
      %p96 = pneg %p90
      %p97 = scmp.eq.s32.totalorder %s20, 1
      %p98 = por %p96, %p97
      %p99 = scmp.ne.s32.totalorder %s91, %s94
      %p100 = scmp.eq.s32.totalorder %s20, 0
      %p101 = por %p99, %p100
      %p102 = scmp.ne.s32.totalorder %s91, %s94
      %p103 = scmp.eq.s32.totalorder %s25, 1
      %p104 = por %p102, %p103
      %p105 = scmp.ne.s32.totalorder %s94, %s95
      %p106 = scmp.eq.s32.totalorder %s25, 0
      %p107 = por %p105, %p106
      %p108 = scmp.ne.s32.totalorder %s94, %s95
      %p109 = scmp.eq.s32.totalorder %s26, 1
      %p110 = por %p108, %p109
      %p112 = scmp.ne.s32.totalorder %s95, %s111
      %p113 = scmp.eq.s32.totalorder %s26, 0
      %p114 = por %p112, %p113
      %s116 = sadd.s32 %s115, 1
      %p119 = scmp.eq.s32.totalorder %s20, 1
      %p120 = scmp.ne.s32.totalorder %s115, %s117
      %p121 = scmp.eq.s32.totalorder %s20, 0
      %p122 = por %p120, %p121
      %p123 = scmp.ne.s32.totalorder %s115, %s117
      %p124 = scmp.eq.s32.totalorder %s25, 1
      %p125 = por %p123, %p124
      %p126 = scmp.ne.s32.totalorder %s117, %s118
      %p127 = scmp.eq.s32.totalorder %s25, 0
      %p128 = por %p126, %p127
      %p129 = scmp.ne.s32.totalorder %s117, %s118
      %p130 = scmp.eq.s32.totalorder %s26, 1
      %p131 = por %p129, %p130
      %p133 = scmp.ne.s32.totalorder %s118, %s132
      %p134 = scmp.eq.s32.totalorder %s26, 0
      %p135 = por %p133, %p134
      %s136 = ssub.s32 %s27, %s46
      %s137 = ssub.s32 %s28, %s42
      %s138 = sor.u32 %s136, %s137
      %p139 = scmp.eq.s32.totalorder %s138, 0
      %s141 = sadd.s32 %s140, 1
      %s142 = scalar_select %p139, %s140, %s141
      %p145 = pneg %p139
      %p146 = scmp.eq.s32.totalorder %s20, 1
      %p147 = por %p145, %p146
      %p148 = scmp.ne.s32.totalorder %s140, %s143
      %p149 = scmp.eq.s32.totalorder %s20, 0
      %p150 = por %p148, %p149
      %p151 = scmp.ne.s32.totalorder %s140, %s143
      %p152 = scmp.eq.s32.totalorder %s25, 1
      %p153 = por %p151, %p152
      %p154 = scmp.ne.s32.totalorder %s143, %s144
      %p155 = scmp.eq.s32.totalorder %s25, 0
      %p156 = por %p154, %p155
      %p157 = scmp.ne.s32.totalorder %s143, %s144
      %p158 = scmp.eq.s32.totalorder %s26, 1
      %p159 = por %p157, %p158
      %p161 = scmp.ne.s32.totalorder %s144, %s160
      %p162 = scmp.eq.s32.totalorder %s26, 0
      %p163 = por %p161, %p162
      %s164 = ssub.s32 %s27, %s46
      %s165 = ssub.s32 %s28, %s42
      %s166 = sor.u32 %s164, %s165
      %p167 = scmp.eq.s32.totalorder %s166, 0
      %s169 = sadd.s32 %s168, 1
      %s170 = scalar_select %p167, %s168, %s169
      %p173 = pneg %p167
      %p174 = scmp.eq.s32.totalorder %s20, 1
      %p175 = por %p173, %p174
      %p176 = scmp.ne.s32.totalorder %s168, %s171
      %p177 = scmp.eq.s32.totalorder %s20, 0
      %p178 = por %p176, %p177
      %p179 = scmp.ne.s32.totalorder %s168, %s171
      %p180 = scmp.eq.s32.totalorder %s25, 1
      %p181 = por %p179, %p180
      %p182 = scmp.ne.s32.totalorder %s171, %s172
      %p183 = scmp.eq.s32.totalorder %s25, 0
      %p184 = por %p182, %p183
      %p185 = scmp.ne.s32.totalorder %s171, %s172
      %p186 = scmp.eq.s32.totalorder %s26, 1
      %p187 = por %p185, %p186
      %p189 = scmp.ne.s32.totalorder %s172, %s188
      %p190 = scmp.eq.s32.totalorder %s26, 0
      %p191 = por %p189, %p190
      %p192 = scmp.le.s32.totalorder 1, %s20
      %p193 = scmp.lt.s32.totalorder %s20, 3
      %p194 = pnand %p192, %p193
      %p195 = pneg %p194
      // Predicated region
      $region9: #{tpu_custom_call.1} parent=5 // pred_check
        _
      $region10: #{tpu_custom_call.1} parent=5 // pred_check_branch
        %197 = sbr.rel (%p194) target = $region12
      $region11: #{tpu_custom_call.1} parent=5 // pred_region
        %s198 = ssub.s32 %s20, 1
        // Predicated region
        $region13: #{tpu_custom_call.1} parent=11 // pred_check
          %p199 = pneg %p128
        $region14: #{tpu_custom_call.1} parent=11 // pred_check_branch
          %201 = sbr.rel (%p199) target = $region16
        $region15: #{tpu_custom_call.1} parent=11 // pred_region
          _
        $region16: #{tpu_custom_call.1} parent=11 // pred_fallthru
          _
      $region12: #{tpu_custom_call.1} parent=5 // pred_fallthru
        _
      %p202 = scmp.lt.s32.totalorder %s20, 2
      // Predicated region
      $region17: #{tpu_custom_call.1} parent=5 // pred_check
        %p203 = pneg %p202
      $region18: #{tpu_custom_call.1} parent=5 // pred_check_branch
        %205 = sbr.rel (%p203) target = $region20
      $region19: #{tpu_custom_call.1} parent=5 // pred_region
        // Predicated region
        $region21: #{tpu_custom_call.1} parent=19 // pred_check
          %p206 = pneg %p67
        $region22: #{tpu_custom_call.1} parent=19 // pred_check_branch
          %208 = sbr.rel (%p206) target = $region24
        $region23: #{tpu_custom_call.1} parent=19 // pred_region
          %s209 = sand.u32 %s57, 1
          %s210 = scalar_lea.sflag [#allocation3], %s209
          %s211 = sand.u32 %s57, 1
          %s212 = smul.addr %s211, 8
          %s213 = scalar_lea.vmem [#allocation2], %s212
          %s214 = sadd.s32 %s28, %s29
          %p215 = scmp.lt.s32.totalorder %s214, 0
          %s216 = scalar_select %p215, %s214, 0
          %s218 = ssub.s32 128, 128
          %219 = vsyncadd %s210, %s218
          %s220 = smul.addr %s27, 4
          %s221 = sadd.s32 %s216, %s220
          %s222 = smul.addr %s221, 32
          %s223 = scalar_lea.hbm %s0, %s222
          %s224 = sshll.u32 %s213, 4
          %s225 = int_to_ptr.vmem [resolvable:$true] %s224
          %230 = dma.hbm_to_vmem [thread:$0]  %s223, 128, %s225, %s210, 32, 32, 2
        $region24: #{tpu_custom_call.1} parent=19 // pred_fallthru
          _
        // Predicated region
        $region25: #{tpu_custom_call.1} parent=19 // pred_check
          %p231 = pneg %p101
        $region26: #{tpu_custom_call.1} parent=19 // pred_check_branch
          %233 = sbr.rel (%p231) target = $region28
        $region27: #{tpu_custom_call.1} parent=19 // pred_region
          %s234 = sadd.s32 %s28, %s29
          %p235 = scmp.lt.s32.totalorder %s234, 0
          %s236 = scalar_select %p235, %s234, 0
          %p237 = scmp.lt.s32.totalorder %s27, 1
          %s238 = scalar_select %p237, %s27, 1
          %p239 = scmp.lt.s32.totalorder %s236, 0
          %s240 = scalar_select %p239, %s236, 0
          %s241 = sadd.s32 %s240, %s238
          %s242 = smul.addr %s241, 2
          %s243 = scalar_lea.vmem %s1, %s242
          %s244 = sadd.s32 %s28, %s29
          %p245 = scmp.lt.s32.totalorder %s244, 0
          %s246 = scalar_select %p245, %s244, 0
        $region28: #{tpu_custom_call.1} parent=19 // pred_fallthru
          _
      $region20: #{tpu_custom_call.1} parent=5 // pred_fallthru
        _
      %p247 = scmp.le.s32.totalorder 1, %s20
      %p248 = scmp.lt.s32.totalorder %s20, 3
      %p249 = pnand %p247, %p248
      %p250 = pneg %p249
      // Predicated region
      $region29: #{tpu_custom_call.1} parent=5 // pred_check
        _
      $region30: #{tpu_custom_call.1} parent=5 // pred_check_branch
        %252 = sbr.rel (%p249) target = $region32
      $region31: #{tpu_custom_call.1} parent=5 // pred_region
        %s253 = ssub.s32 %s20, 1
        %s254 = sand.u32 %s60, 1
        %s255 = scalar_lea.sflag [#allocation3], %s254
        %s256 = sand.u32 %s60, 1
        %s257 = smul.addr %s256, 8
        %s258 = scalar_lea.vmem [#allocation2], %s257
        // Predicated region
        $region33: #{tpu_custom_call.1} parent=31 // pred_check
          %p259 = pneg %p73
        $region34: #{tpu_custom_call.1} parent=31 // pred_check_branch
          %261 = sbr.rel (%p259) target = $region36
        $region35: #{tpu_custom_call.1} parent=31 // pred_region
          %262 = dma.done %s255, 128
        $region36: #{tpu_custom_call.1} parent=31 // pred_fallthru
          _
        %s263 = sand.u32 %s60, 1
        %s264 = scalar_lea.sflag [#allocation3], %s263
        %s265 = sand.u32 %s60, 1
        %s266 = smul.addr %s265, 8
        %s267 = scalar_lea.vmem [#allocation2], %s266
        %p268 = pneg %p73
        %p269 = pneg %p70
        %s270 = sadd.s32 %s31, %s32
        %p271 = scmp.lt.s32.totalorder %s270, 0
        %s272 = scalar_select %p271, %s270, 0
        %p273 = scmp.lt.s32.totalorder %s30, 1
        %s274 = scalar_select %p273, %s30, 1
        %p275 = scmp.lt.s32.totalorder %s272, 0
        %s276 = scalar_select %p275, %s272, 0
        %s277 = sadd.s32 %s276, %s274
        %s278 = smul.addr %s277, 2
        %s279 = scalar_lea.vmem %s1, %s278
        %p280 = pneg %p107
        %p281 = pneg %p104
        %p282 = pneg %p128
        %p283 = pneg %p125
        %p284 = pneg %p156
        %p285 = pneg %p153
        %s286 = sand.u32 %s143, 1
        %s287 = scalar_lea.sflag [#allocation4], %s286
        %s288 = sand.u32 %s143, 1
        %s289 = smul.addr %s288, 2
        %s290 = scalar_lea.vmem [#allocation5], %s289
        %p291 = pneg %p184
        %p292 = pneg %p181
        %s293 = sand.u32 %s171, 1
        %s294 = scalar_lea.sflag [#allocation7], %s293
        %s295 = sand.u32 %s171, 1
        %s296 = smul.addr %s295, 2
        %s297 = scalar_lea.vmem [#allocation6], %s296
        %s298 = sadd.s32 %s31, %s32
        %p299 = scmp.lt.s32.totalorder %s298, 0
        %s300 = scalar_select %p299, %s298, 0
        %s301 = sadd.s32 %s31, %s32
        %p302 = scmp.lt.s32.totalorder %s301, 0
        %s303 = scalar_select %p302, %s301, 0
        %p304 = scmp.lt.s32.totalorder %s30, 1
        %s305 = scalar_select %p304, %s30, 1
        %p306 = scmp.lt.s32.totalorder %s303, 0
        %s307 = scalar_select %p306, %s303, 0
        %s308 = sadd.s32 %s307, %s305
        %s309 = smul.addr %s308, 2
        %s310 = scalar_lea.vmem %s1, %s309
        %s311 = sadd.s32 %s31, %s32
        %p312 = scmp.lt.s32.totalorder %s311, 0
        %s313 = scalar_select %p312, %s311, 0
        %p314 = scmp.eq.s32.totalorder %s32, 0
        // Predicated region
        $region37: #{tpu_custom_call.1} parent=31 // pred_check
          %p315 = pneg %p314
        $region38: #{tpu_custom_call.1} parent=31 // pred_check_branch
          %317 = sbr.rel (%p315) target = $region40
        $region39: #{tpu_custom_call.1} parent=31 // pred_region
          %318 = vst [vmem:[%s290] sm:$0x3] 0.0
          %319 = vst [vmem:[%s297] sm:$0x3] 0.0
        $region40: #{tpu_custom_call.1} parent=31 // pred_fallthru
          _
        %v320 = vld [vmem:[%s258] sm:$0x3]
        %v321 = vld [vmem:[%s258 + $0x2] sm:$0x3]
        %v322 = vld [vmem:[%s258 + $0x4] sm:$0x3]
        %v323 = vld [vmem:[%s258 + $0x6] sm:$0x3]
        %v324 = vld [vmem:[%s310] sm:$0x3]
        %v325 = vld [vmem:[%s2] sm:$0x1]
        %v326 = vld [vmem:[%s2 + $0x1] sm:$0x1]
        %v327 = vld [vmem:[%s2 + $0x2] sm:$0x1]
        %v328 = vld [vmem:[%s2 + $0x3] sm:$0x1]
        %s329 = sadd.s32 %s31, %s32
        %v330 = vlaneseq
        %v331 = vshrl.u32 %v330, 7
        %s332 = smul.u32 %s329, 2
        %v333 = vstv %s332
        %v334 = vadd.s32 %v333, %v331
        %vm335 = vcmp.lt.s32.totalorder %v334, 2
        %vm336 = vcmask 1041408
        %v337 = vsel %vm336, %v320, -inf
        %v338 = vsel %vm336, %v321, -inf
        %v339 = vsel %vm336, %v322, -inf
        %v340 = vsel %vm336, %v323, -inf
        %v341 = vmax.f32 %v337, %v338
        %v342 = vmax.f32 %v339, %v340
        %v343 = vmax.f32 %v341, %v342
        %v344 = vsub.f32 %v320, %v343
        %v345 = vsub.f32 %v321, %v343
        %v346 = vsub.f32 %v322, %v343
        %v347 = vsub.f32 %v323, %v343
        %v348 = vmul.f32 %v344, 1.442695
        %v349 = vpow.pop %v348
        %v350 = vmul.f32 %v345, 1.442695
        %v351 = vpow.pop %v350
        %v352 = vmul.f32 %v346, 1.442695
        %v353 = vpow.pop %v352
        %v354 = vmul.f32 %v347, 1.442695
        %v355 = vpow.pop %v354
        %v356 = vsel %vm336, %v349, 0.0
        %v357 = vsel %vm336, %v351, 0.0
        %v358 = vadd.f32 %v356, %v357
        %v359 = vsel %vm336, %v353, 0.0
        %v360 = vadd.f32 %v358, %v359
        %v361 = vsel %vm336, %v355, 0.0
        %v362 = vadd.f32 %v360, %v361
        %v363 = vlog2.pop %v362
        %v364 = vmul.f32 %v363, 0.6931472
        %v365 = vadd.f32 %v343, %v364
        %vm366 = vcmp.eq.s32.totalorder %v324, 0
        %vm367 = vcmp.eq.s32.totalorder %v324, 1
        %vm368 = vcmp.eq.s32.totalorder %v324, 2
        %vm369 = vcmp.eq.s32.totalorder %v324, 3
        %v370 = vsel %vm366, %v320, 0.0
        %v371 = vsel %vm367, %v321, 0.0
        %v372 = vsel %vm368, %v322, 0.0
        %v373 = vsel %vm369, %v323, 0.0
        %v374 = vsel %vm336, %v370, 0.0
        %v375 = vsel %vm336, %v371, 0.0
        %v376 = vadd.f32 %v374, %v375
        %v377 = vsel %vm336, %v372, 0.0
        %v378 = vadd.f32 %v376, %v377
        %v379 = vsel %vm336, %v373, 0.0
        %v380 = vadd.f32 %v378, %v379
        %v385 = vlaneseq
        %v386 = vshrl.u32 %v385, 7
        %v387 = vsub.s32 0, %v386
        %v388 = vrot.slane %v325, %v387
        %v389 = vlaneseq
        %v390 = vshrl.u32 %v389, 7
        %v391 = vsub.s32 0, %v390
        %v392 = vrot.slane %v326, %v391
        %v393 = vlaneseq
        %v394 = vshrl.u32 %v393, 7
        %v395 = vsub.s32 0, %v394
        %v396 = vrot.slane %v327, %v395
        %v397 = vlaneseq
        %v398 = vshrl.u32 %v397, 7
        %v399 = vsub.s32 0, %v398
        %v400 = vrot.slane %v328, %v399
        %401 = vset.pattern.permute.xlu0 0
        %402 = vperm.xlu0 %401, %v388
        %v403 = vpop.permute.xlu0 %402
        %405 = vset.pattern.permute.xlu0 0
        %406 = vperm.xlu0 %405, %v392
        %v407 = vpop.permute.xlu0 %406
        %409 = vset.pattern.permute.xlu0 0
        %410 = vperm.xlu0 %409, %v396
        %v411 = vpop.permute.xlu0 %410
        %413 = vset.pattern.permute.xlu0 0
        %414 = vperm.xlu0 %413, %v400
        %v415 = vpop.permute.xlu0 %414
        %v417 = vsel %vm366, %v403, 0.0
        %v418 = vsel %vm367, %v407, 0.0
        %v419 = vsel %vm368, %v411, 0.0
        %v420 = vsel %vm369, %v415, 0.0
        %v421 = vsel %vm336, %v417, 0.0
        %v422 = vsel %vm336, %v418, 0.0
        %v423 = vadd.f32 %v421, %v422
        %v424 = vsel %vm336, %v419, 0.0
        %v425 = vadd.f32 %v423, %v424
        %v426 = vsel %vm336, %v420, 0.0
        %v427 = vadd.f32 %v425, %v426
        %v428 = vsub.f32 %v365, %v380
        %v429 = vmul.f32 %v427, %v428
        %vm430 = vcmp.ge.s32.totalorder %v324, 0
        %vm431 = vmand %vm335, %vm430
        %vm432 = vcmp.ne.s32.totalorder %v324, 4294967295
        %vm433 = vmand %vm431, %vm432
        %v434 = vld [vmem:[%s290] sm:$0x3]
        %v435 = vsel %vm433, %v429, 0.0
        %v436 = vadd.f32 %v434, %v435
        %437 = vst [vmem:[%s290] sm:$0x3] %v436
        %v438 = vld [vmem:[%s297] sm:$0x3]
        %v439 = vsel %vm431, 1, 0
        %v440 = vcvt.s32.f32 %v439
        %v441 = vadd.f32 %v438, %v440
        %442 = vst [vmem:[%s297] sm:$0x3] %v441
        %s443 = sand.u32 %s143, 1
        %s444 = scalar_lea.sflag [#allocation4], %s443
        %s445 = sand.u32 %s143, 1
        %s446 = smul.addr %s445, 2
        %s447 = scalar_lea.vmem [#allocation5], %s446
        %s448 = sand.u32 %s171, 1
        %s449 = scalar_lea.sflag [#allocation7], %s448
        %s450 = sand.u32 %s171, 1
        %s451 = smul.addr %s450, 2
        %s452 = scalar_lea.vmem [#allocation6], %s451
        // Predicated region
        $region41: #{tpu_custom_call.1} parent=31 // pred_check
          %p453 = pneg %p153
        $region42: #{tpu_custom_call.1} parent=31 // pred_check_branch
          %455 = sbr.rel (%p453) target = $region44
        $region43: #{tpu_custom_call.1} parent=31 // pred_region
          %s457 = ssub.s32 32, 32
          %458 = vsyncadd %s444, %s457
          %s459 = sadd.s32 %s31, %s30
          %s460 = smul.addr %s459, 32
          %s461 = scalar_lea.hbm %s3, %s460
          %s463 = sshll.u32 %s447, 4
          %s464 = int_to_ptr.vmem [resolvable:$true] %s463
          %466 = dma.vmem_to_hbm [thread:$0]  %s464, 32, %s461, %s444
        $region44: #{tpu_custom_call.1} parent=31 // pred_fallthru
          _
        // Predicated region
        $region45: #{tpu_custom_call.1} parent=31 // pred_check
          %p467 = pneg %p181
        $region46: #{tpu_custom_call.1} parent=31 // pred_check_branch
          %469 = sbr.rel (%p467) target = $region48
        $region47: #{tpu_custom_call.1} parent=31 // pred_region
          %s471 = ssub.s32 32, 32
          %472 = vsyncadd %s449, %s471
          %s473 = sadd.s32 %s31, %s30
          %s474 = smul.addr %s473, 32
          %s475 = scalar_lea.hbm %s4, %s474
          %s477 = sshll.u32 %s452, 4
          %s478 = int_to_ptr.vmem [resolvable:$true] %s477
          %480 = dma.vmem_to_hbm [thread:$0]  %s478, 32, %s475, %s449
        $region48: #{tpu_custom_call.1} parent=31 // pred_fallthru
          _
      $region32: #{tpu_custom_call.1} parent=5 // pred_fallthru
        _
      %p481 = scmp.le.s32.totalorder 2, %s20
      // Predicated region
      $region49: #{tpu_custom_call.1} parent=5 // pred_check
        %p482 = pneg %p481
      $region50: #{tpu_custom_call.1} parent=5 // pred_check_branch
        %484 = sbr.rel (%p482) target = $region52
      $region51: #{tpu_custom_call.1} parent=5 // pred_region
        %s485 = ssub.s32 %s20, 2
        // Predicated region
        $region53: #{tpu_custom_call.1} parent=51 // pred_check
          %p486 = pneg %p159
        $region54: #{tpu_custom_call.1} parent=51 // pred_check_branch
          %488 = sbr.rel (%p486) target = $region56
        $region55: #{tpu_custom_call.1} parent=51 // pred_region
          %s489 = sand.u32 %s144, 1
          %s490 = scalar_lea.sflag [#allocation4], %s489
          %s491 = sand.u32 %s144, 1
          %s492 = smul.addr %s491, 2
          %s493 = scalar_lea.vmem [#allocation5], %s492
          %494 = dma.done %s490, 32
        $region56: #{tpu_custom_call.1} parent=51 // pred_fallthru
          _
        // Predicated region
        $region57: #{tpu_custom_call.1} parent=51 // pred_check
          %p495 = pneg %p187
        $region58: #{tpu_custom_call.1} parent=51 // pred_check_branch
          %497 = sbr.rel (%p495) target = $region60
        $region59: #{tpu_custom_call.1} parent=51 // pred_region
          %s498 = sand.u32 %s172, 1
          %s499 = scalar_lea.sflag [#allocation7], %s498
          %s500 = sand.u32 %s172, 1
          %s501 = smul.addr %s500, 2
          %s502 = scalar_lea.vmem [#allocation6], %s501
          %503 = dma.done %s499, 32
        $region60: #{tpu_custom_call.1} parent=51 // pred_fallthru
          _
      $region52: #{tpu_custom_call.1} parent=5 // pred_fallthru
        _
    $region6: #{tpu_custom_call.1} parent=1 // loop_footer
      %s24 = sadd.s32 1, %s20
    $region7: #{tpu_custom_call.1} parent=1 // loop_footer_branch
      %19 = sbr.rel target = $region3
    $region8: #{tpu_custom_call.1} parent=1 // loop_exit
      _
    %504 = vsyncpa [#allocation3], 1
    %s505 = scalar_lea.sflag [#allocation3], 1
    %506 = vsyncpa %s505, 1
    %507 = vsyncpa [#allocation4], 1
    %s508 = scalar_lea.sflag [#allocation4], 1
    %509 = vsyncpa %s508, 1
    %510 = vsyncpa [#allocation7], 1
    %s511 = scalar_lea.sflag [#allocation7], 1
    %512 = vsyncpa %s511, 1

</llo_original>
